<compile_context>
chip_gen: v7x
topology: tpu7x:2x2x1
jax: 0.10.0
libtpu: 0.0.40
codegen_flags: <defaults>
</compile_context>

<pallas_src>
import jax
import jax.numpy as jnp
from jax import lax
from jax.experimental import pallas as pl
from jax.experimental.pallas import tpu as pltpu

KL_DIV_COEFF = 0.0   # module default (kl_div_coeff=0.0)
# baseline='no' -> NoBaseline.predict(_) == 0, so reward == sr_loss.detach()


def _cdiv(a, b):
    return (a + b - 1) // b


def _round_up(a, b):
    return _cdiv(a, b) * b


def _l2_normalize_f32(x):
    x32 = x.astype(jnp.float32)
    return x32 * lax.rsqrt(jnp.sum(x32 * x32, axis=-1, keepdims=True) + 1e-12)


# -----------------------------------------------------------------------------
# Single-block kernel: whole (B,B) sims resident, scalar aux reduced into SMEM.
# -----------------------------------------------------------------------------
def _game_kernel_single(kl_ref, text_ref, img_ref, logp_ref,
                        sr_ref, acc_ref, acc5_ref, scal_ref):
    # inputs : kl_ref (1,) SMEM f32 ; text/img (B,D) VMEM native dtype ;
    #          logp_ref (B,1) VMEM f32
    # outputs: sr/acc/acc5 (B,1) VMEM f32 ; scal_ref (7,) SMEM f32
    B = text_ref.shape[0]

    # normalize in f32, feed the MXU with bf16 operands (native rate on all
    # generations; contrastive logits feeding a softmax tolerate bf16)
    t_op = _l2_normalize_f32(text_ref[...]).astype(jnp.bfloat16)     # (B, D)
    v_op = _l2_normalize_f32(img_ref[...]).astype(jnp.bfloat16)      # (B, D)

    # matched-pair cosine similarity from the SAME bf16 operand values the MXU
    # sees (consistent with sims up to accumulation order) — no BxB pass
    diag = jnp.sum(t_op.astype(jnp.float32) * v_op.astype(jnp.float32),
                   axis=-1, keepdims=True)                            # (B, 1)

    # similarity matrix on the MXU; NT contraction, f32 accumulation
    sims = lax.dot_general(t_op, v_op,
                           dimension_numbers=(((1,), (1,)), ((), ())),
                           preferred_element_type=jnp.float32)        # (B, B)

    row_max = jnp.max(sims, axis=1, keepdims=True)                    # (B, 1)
    # per-sample F.cross_entropy(sims, arange(B), reduction='none')
    lse = row_max + jnp.log(jnp.sum(jnp.exp(sims - row_max),
                                    axis=1, keepdims=True))
    sr_loss = lse - diag                                              # (B, 1)

    # acc@1 : first argmax index == i (PyTorch argmax tie-break = first index)
    col_ids = lax.broadcasted_iota(jnp.int32, (B, B), 1)
    gt_col = lax.broadcasted_iota(jnp.int32, (B, 1), 0)
    first_max = jnp.min(jnp.where(sims == row_max, col_ids, jnp.int32(B)),
                        axis=1, keepdims=True)                        # (B, 1)
    acc = (first_max == gt_col).astype(jnp.float32)

    # acc@5 : strictly-greater rank < 5; ground-truth column excluded so MXU /
    # VPU ulp differences on the diagonal can never shift the rank
    rank = jnp.sum(((sims > diag) & (col_ids != gt_col)).astype(jnp.int32),
                   axis=1, keepdims=True)
    acc5 = (rank < 5).astype(jnp.float32)

    # per-sample outputs (tiny payload; masked (B,1) stores are acceptable)
    sr_ref[...] = sr_loss
    acc_ref[...] = acc
    acc5_ref[...] = acc5

    # scalar aux -> SMEM (natural scalar path)
    logp = logp_ref[...].astype(jnp.float32)                          # (B, 1)
    inv_b = jnp.float32(1.0 / B)
    kl = kl_ref[0]
    scal_ref[0] = jnp.sum(sr_loss * logp) * inv_b   # reinforce loss (returned)
    scal_ref[1] = jnp.sum(sr_loss) * inv_b          # reward.mean() (baseline='no')
    scal_ref[2] = jnp.sum(acc) * inv_b              # acc / batch_acc1
    scal_ref[3] = jnp.sum(acc5) * inv_b             # acc_5
    scal_ref[4] = jnp.sum(logp) * inv_b             # mean log_prob
    scal_ref[5] = jnp.float32(KL_DIV_COEFF) * kl    # weighted_kl_div
    scal_ref[6] = kl                                # kl_div


# -----------------------------------------------------------------------------
# Row-tiled kernel (large B / v7x): grid over query-row stripes ('parallel' so
# v7x's two TensorCores split stripes).  The image operand is pre-normalized
# bf16 (wrapper) and resident in VMEM with a single buffer; the matched image
# stripe for the diagonal arrives via its own blocked BlockSpec.  Scalar means
# are tiny and computed in the wrapper (avoids cross-stripe accumulation on a
# parallel axis).
# -----------------------------------------------------------------------------
def _game_kernel_tiled(text_ref, imgn_ref, imgm_ref, sr_ref, acc_ref, acc5_ref):
    tq = text_ref.shape[0]
    B = imgn_ref.shape[0]
    qi = pl.program_id(0)

    t_op = _l2_normalize_f32(text_ref[...]).astype(jnp.bfloat16)      # (tq, D)
    v_op = imgn_ref[...]                                              # (B, D) bf16, resident
    v_match = imgm_ref[...]                                           # (tq, D) bf16 stripe

    # diagonal of the global sims matrix from the same bf16 operand values
    diag = jnp.sum(t_op.astype(jnp.float32) * v_match.astype(jnp.float32),
                   axis=-1, keepdims=True)                            # (tq, 1)

    sims = lax.dot_general(t_op, v_op,
                           dimension_numbers=(((1,), (1,)), ((), ())),
                           preferred_element_type=jnp.float32)        # (tq, B)

    row_max = jnp.max(sims, axis=1, keepdims=True)
    lse = row_max + jnp.log(jnp.sum(jnp.exp(sims - row_max),
                                    axis=1, keepdims=True))
    sr_ref[...] = lse - diag

    col_ids = lax.broadcasted_iota(jnp.int32, (tq, B), 1)
    gt_col = qi * tq + lax.broadcasted_iota(jnp.int32, (tq, 1), 0)
    first_max = jnp.min(jnp.where(sims == row_max, col_ids, jnp.int32(B)),
                        axis=1, keepdims=True)
    acc_ref[...] = (first_max == gt_col).astype(jnp.float32)

    rank = jnp.sum(((sims > diag) & (col_ids != gt_col)).astype(jnp.int32),
                   axis=1, keepdims=True)
    acc5_ref[...] = (rank < 5).astype(jnp.float32)
    # TODO(synk): for very large B a column-blocked online (flash-softmax
    # style) pass would avoid re-streaming the (tq,B) sims stripe 4x.


# -----------------------------------------------------------------------------
# VMEM accounting & tile choice
# -----------------------------------------------------------------------------
def _single_footprint(B, D, in_itemsize):
    # two untiled inputs + f32 normalized copies + bf16 operands
    # + sims and ~3 (B,B)-sized temporaries + small per-sample outputs
    return (B * D * (2 * in_itemsize + 2 * 4 + 2 * 2)
            + 4 * B * B * 4 + 8 * B * 4)


def _tiled_footprint(B, D, tq, in_itemsize):
    resident = B * D * 2                       # pre-normalized bf16 img (1 buffer)
    pipelined = 2 * tq * D * in_itemsize       # text stripe, double-buffered
    pipelined += 2 * tq * D * 2                # matched img stripe, double-buffered
    body = tq * D * (4 + 2)                    # f32-normalized text + bf16 operand
    body += 4 * tq * B * 4                     # sims + ~3 (tq,B) temporaries
    outs = 3 * 2 * tq * 4                      # (tq,1) outputs, double-buffered
    return resident + pipelined + body + outs


def _tpu_env():
    try:
        vmem_cap = int(pltpu.get_tpu_info().vmem_capacity_bytes)
    except Exception:
        vmem_cap = 64 * 1024 * 1024            # v7x-safe fallback
    try:
        kind = jax.devices()[0].device_kind.lower()
    except Exception:
        kind = ""
    return vmem_cap, kind


def _choose_query_tile(B, D, in_itemsize, vmem_cap, kind):
    # v5e MXU is 128-wide (tq=128 already fills a tile); v6e/v7x are 256-wide.
    tq_floor = 128 if "v5" in kind else 256
    # v7x has 2 TensorCores: prefer >=2 balanced stripes when B allows it.
    prefer_tiled = ("v7" in kind) and (B >= 2 * tq_floor)

    budget = int(0.70 * vmem_cap)              # headroom for pipeline/internal scratch
    single_ok = _single_footprint(B, D, in_itemsize) <= budget
    if single_ok and not prefer_tiled:
        return None

    cands = [t for t in (4096, 2048, 1024, 512, 256, 128, 64, 32, 16, 8)
             if (t >= tq_floor or not single_ok)
             and t <= max(tq_floor, _round_up(B, 8))]
    if not cands:
        cands = [tq_floor]
    fitting = [t for t in cands if _tiled_footprint(B, D, t, in_itemsize) <= budget]
    if not fitting:
        return None if single_ok else cands[-1]      # last resort: smallest stripe
    # prefer an even stripe count >= 2 (balances the v7x 2-core parallel split)
    even = [t for t in fitting if _cdiv(B, t) >= 2 and _cdiv(B, t) % 2 == 0]
    return (even or fitting)[0]


# -----------------------------------------------------------------------------
# Wrapper
# -----------------------------------------------------------------------------
def reinforce_caption_game_forward(text_feats, img_feats, log_prob, kl_div,
                                   *, query_tile=None):
    """Returns (loss, aux_info, reward_mean) like ReinforceCaptionGame.forward
    (training, DiscriminativeLoss, baseline='no', kl_div_coeff=0)."""
    B, D = text_feats.shape
    assert img_feats.shape == (B, D)
    logp2d = jnp.asarray(log_prob, jnp.float32).reshape(B, 1)
    kl1 = jnp.asarray(kl_div, jnp.float32).reshape(1)

    in_itemsize = jnp.dtype(text_feats.dtype).itemsize
    vmem_cap, kind = _tpu_env()

    if query_tile is None:
        query_tile = _choose_query_tile(B, D, in_itemsize, vmem_cap, kind)

    if query_tile is None:
        # -------- single-block path (small/medium B) --------------------------
        footprint = _single_footprint(B, D, in_itemsize)
        vmem_limit = int(min(0.92 * vmem_cap, max(1.3 * footprint, 16 << 20)))
        cost = pl.CostEstimate(
            flops=2 * B * B * D,
            transcendentals=B * B,
            bytes_accessed=2 * B * D * in_itemsize + 4 * B * 4 + 8 * 4)
        sr, acc, acc5, scal = pl.pallas_call(
            _game_kernel_single,
            out_shape=(
                jax.ShapeDtypeStruct((B, 1), jnp.float32),
                jax.ShapeDtypeStruct((B, 1), jnp.float32),
                jax.ShapeDtypeStruct((B, 1), jnp.float32),
                jax.ShapeDtypeStruct((7,), jnp.float32),
            ),
            in_specs=[
                pl.BlockSpec(memory_space=pltpu.MemorySpace.SMEM),   # kl_div
                pl.BlockSpec(memory_space=pltpu.MemorySpace.VMEM),   # text
                pl.BlockSpec(memory_space=pltpu.MemorySpace.VMEM),   # img
                pl.BlockSpec(memory_space=pltpu.MemorySpace.VMEM),   # log_prob
            ],
            out_specs=(
                pl.BlockSpec(memory_space=pltpu.MemorySpace.VMEM),
                pl.BlockSpec(memory_space=pltpu.MemorySpace.VMEM),
                pl.BlockSpec(memory_space=pltpu.MemorySpace.VMEM),
                pl.BlockSpec(memory_space=pltpu.MemorySpace.SMEM),
            ),
            compiler_params=pltpu.CompilerParams(vmem_limit_bytes=vmem_limit),
            cost_estimate=cost,
        )(kl1, text_feats, img_feats, logp2d)

        loss = scal[0]
        reward_mean = scal[1]
        acc_mean, acc5_mean = scal[2], scal[3]
        logp_mean, weighted_kl, kl_out = scal[4], scal[5], scal[6]
        sr_ps = sr[:, 0]
    else:
        # -------- row-tiled 'parallel' path (large B / v7x) -------------------
        tq = max(8, _round_up(int(query_tile), 8))
        n_stripes = _cdiv(B, tq)
        Bq = n_stripes * tq

        # Hoisted image-side normalization: runs ONCE (not per stripe / core).
        # Operand stored bf16 -> native MXU rate, half the resident VMEM bytes.
        img32 = img_feats.astype(jnp.float32)
        img_op = (img32 * lax.rsqrt(jnp.sum(img32 * img32, axis=-1,
                                            keepdims=True) + 1e-12)
                  ).astype(jnp.bfloat16)                              # (B, D)

        text_p, img_m = text_feats, img_op
        if Bq != B:
            # pad only the query/row axis; columns stay exactly B, so padded
            # rows produce garbage outputs that are simply dropped below.
            text_p = jnp.pad(text_feats, ((0, Bq - B), (0, 0)))
            img_m = jnp.pad(img_op, ((0, Bq - B), (0, 0)))

        footprint = _tiled_footprint(B, D, tq, in_itemsize)
        vmem_limit = int(min(0.92 * vmem_cap, max(1.3 * footprint, 16 << 20)))
        cost = pl.CostEstimate(
            flops=2 * Bq * B * D,
            transcendentals=Bq * B,
            bytes_accessed=(Bq * D * in_itemsize + B * D * 2 + Bq * D * 2
                            + 3 * Bq * 4))

        sr, acc, acc5 = pl.pallas_call(
            _game_kernel_tiled,
            out_shape=(jax.ShapeDtypeStruct((Bq, 1), jnp.float32),) * 3,
            grid=(n_stripes,),
            in_specs=[
                pl.BlockSpec((tq, D), lambda i: (i, 0)),              # query stripe
                # resident normalized image operand: whole array in VMEM once,
                # single buffer, never re-DMA'd / re-normalized per stripe.
                pl.BlockSpec(memory_space=pltpu.MemorySpace.VMEM),
                pl.BlockSpec((tq, D), lambda i: (i, 0)),              # matched stripe (diag)
            ],
            out_specs=(pl.BlockSpec((tq, 1), lambda i: (i, 0)),) * 3,
            compiler_params=pltpu.CompilerParams(
                dimension_semantics=("parallel",),   # v7x: 2 TCs split stripes
                vmem_limit_bytes=vmem_limit),
            cost_estimate=cost,
        )(text_p, img_op, img_m)

        sr_ps = sr[:B, 0]
        logp_f = logp2d[:, 0]
        loss = jnp.mean(sr_ps * logp_f)
        reward_mean = jnp.mean(sr_ps)
        acc_mean = jnp.mean(acc[:B, 0])
        acc5_mean = jnp.mean(acc5[:B, 0])
        logp_mean = jnp.mean(logp_f)
        kl_out = kl1[0]
        weighted_kl = jnp.float32(KL_DIV_COEFF) * kl_out

    aux_info = {
        "acc": acc_mean,
        "acc_5": acc5_mean,
        "batch_acc1": acc_mean,
        "reinforce": loss,
        "kl_div": kl_out,
        "weighted_kl_div": weighted_kl,
        "log_prob": logp_mean,
        "sr_loss_per_sample": sr_ps,
        # baseline='no' -> reward == sr_loss.detach(); no duplicated output
        "reward_per_sample": sr_ps,
    }
    # TODO(synk): sender (CLIP-prefix GPT2 captioner), receiver (CLIP towers),
    # GPT2Tokenizer, CIDEr-reward / greedy-baseline / MeanBaseline-state paths,
    # eval-only mean/median-rank/clip_s metrics and LoggingStrategy interaction
    # logging are upstream/bookkeeping with no Pallas equivalent.
    return loss, aux_info, reward_mean


# -----------------------------------------------------------------------------
# Pure-JAX reference (DiscriminativeLoss + REINFORCE, baseline='no'),
# evaluated at the kernel's documented MXU operand precision
# (bf16 operands, f32 accumulation).
# -----------------------------------------------------------------------------
def _reference(text_feats, img_feats, log_prob, kl_div):
    def norm_op(x):
        x32 = x.astype(jnp.float32)
        n = x32 * lax.rsqrt(jnp.sum(x32 * x32, axis=-1, keepdims=True) + 1e-12)
        return n.astype(jnp.bfloat16).astype(jnp.float32)

    t = norm_op(text_feats)
    v = norm_op(img_feats)
    sims = lax.dot_general(t, v, dimension_numbers=(((1,), (1,)), ((), ())),
                           precision=lax.Precision.HIGHEST,
                           preferred_element_type=jnp.float32)
    B = sims.shape[0]
    labels = jnp.arange(B)
    lse = jax.scipy.special.logsumexp(sims, axis=1)
    diag = sims[labels, labels]
    sr_loss = lse - diag
    acc = (jnp.argmax(sims, axis=1) == labels).astype(jnp.float32)
    rank = jnp.sum(sims > diag[:, None], axis=1)
    acc5 = (rank < 5).astype(jnp.float32)
    loss = jnp.mean(sr_loss * jnp.asarray(log_prob, jnp.float32))
    return loss, jnp.mean(sr_loss), jnp.mean(acc), jnp.mean(acc5)


if __name__ == "__main__":
    key = jax.random.PRNGKey(0)
    k1, k2, k3, k4 = jax.random.split(key, 4)

    B, D = 16, 128   # small CLIP-feature-like shapes (lane-dense feature dim)
    text_feats = jax.random.normal(k1, (B, D), jnp.float32)
    img_feats = jax.random.normal(k2, (B, D), jnp.float32)
    log_prob = -jnp.abs(jax.random.normal(k3, (B,), jnp.float32))
    kl_div = jnp.abs(jax.random.normal(k4, (), jnp.float32))

    ref_loss, ref_reward, ref_acc, ref_acc5 = _reference(
        text_feats, img_feats, log_prob, kl_div)

    # 1) single-block path (auto layout at this size)
    loss, aux, reward = reinforce_caption_game_forward(
        text_feats, img_feats, log_prob, kl_div)
    jax.block_until_ready((loss, reward))
    assert jnp.allclose(loss, ref_loss, atol=2e-3, rtol=2e-3), (loss, ref_loss)
    assert jnp.allclose(reward, ref_reward, atol=2e-3, rtol=2e-3), (reward, ref_reward)
    assert jnp.allclose(aux["acc"], ref_acc, atol=1e-5), (aux["acc"], ref_acc)
    assert jnp.allclose(aux["acc_5"], ref_acc5, atol=1e-5), (aux["acc_5"], ref_acc5)
    assert jnp.allclose(aux["weighted_kl_div"], 0.0, atol=1e-6)
    assert jnp.allclose(aux["kl_div"], kl_div, atol=1e-6)

    # 2) row-tiled 'parallel' path (large-B / v7x layout), forced tiny stripes
    loss_t, aux_t, reward_t = reinforce_caption_game_forward(
        text_feats, img_feats, log_prob, kl_div, query_tile=8)
    jax.block_until_ready((loss_t, reward_t))
    assert jnp.allclose(loss_t, ref_loss, atol=2e-3, rtol=2e-3), (loss_t, ref_loss)
    assert jnp.allclose(reward_t, ref_reward, atol=2e-3, rtol=2e-3)
    assert jnp.allclose(aux_t["acc"], ref_acc, atol=1e-5)
    assert jnp.allclose(aux_t["acc_5"], ref_acc5, atol=1e-5)

    # 2b) tiled path with a stripe that does NOT divide B (exercises padding)
    loss_p, aux_p, reward_p = reinforce_caption_game_forward(
        text_feats, img_feats, log_prob, kl_div, query_tile=24)
    jax.block_until_ready((loss_p, reward_p))
    assert jnp.allclose(loss_p, ref_loss, atol=2e-3, rtol=2e-3), (loss_p, ref_loss)
    assert jnp.allclose(reward_p, ref_reward, atol=2e-3, rtol=2e-3)
    assert jnp.allclose(aux_p["acc"], ref_acc, atol=1e-5)
    assert jnp.allclose(aux_p["acc_5"], ref_acc5, atol=1e-5)

    # 3) native-bf16 feature path (halved DMA bytes, native-rate MXU)
    tbf = text_feats.astype(jnp.bfloat16)
    ibf = img_feats.astype(jnp.bfloat16)
    ref_loss_bf, ref_reward_bf, ref_acc_bf, _ = _reference(tbf, ibf, log_prob, kl_div)
    loss_bf, aux_bf, reward_bf = reinforce_caption_game_forward(
        tbf, ibf, log_prob, kl_div)
    jax.block_until_ready((loss_bf, reward_bf))
    assert bool(jnp.isfinite(loss_bf)) and bool(jnp.isfinite(reward_bf))
    assert jnp.allclose(loss_bf, ref_loss_bf, atol=2e-3, rtol=2e-3), (loss_bf, ref_loss_bf)
    assert jnp.allclose(reward_bf, ref_reward_bf, atol=2e-3, rtol=2e-3)
    assert jnp.allclose(aux_bf["acc"], ref_acc_bf, atol=1e-5)

    print("KERNEL_OK")
</pallas_src>

<mosaic_0001>
module attributes {stable_mosaic.version = 11 : i64} {
  func.func @_game_kernel_single(%arg0: memref<1xf32, #tpu.memory_space<smem>>, %arg1: memref<16x128xf32, #tpu.memory_space<vmem>>, %arg2: memref<16x128xf32, #tpu.memory_space<vmem>>, %arg3: memref<16x1xf32, #tpu.memory_space<vmem>>, %arg4: memref<16x1xf32, #tpu.memory_space<vmem>>, %arg5: memref<16x1xf32, #tpu.memory_space<vmem>>, %arg6: memref<16x1xf32, #tpu.memory_space<vmem>>, %arg7: memref<7xf32, #tpu.memory_space<smem>>) attributes {dimension_semantics = [], scalar_prefetch = 0 : i64, scratch_operands = 0 : i64, tpu.core_type = #tpu.core_type<tc>} {
    %c0 = arith.constant 0 : index
    %c0_0 = arith.constant 0 : index
    %0 = vector.load %arg1[%c0, %c0_0] : memref<16x128xf32, #tpu.memory_space<vmem>>, vector<16x128xf32>
    %1 = arith.mulf %0, %0 : vector<16x128xf32>
    %cst = arith.constant dense<0.000000e+00> : vector<16xf32>
    %2 = vector.multi_reduction <add>, %1, %cst [1] : vector<16x128xf32> to vector<16xf32>
    %3 = vector.shape_cast %2 : vector<16xf32> to vector<16x1xf32>
    %cst_1 = arith.constant 9.99999996E-13 : f32
    %4 = vector.broadcast %cst_1 : f32 to vector<16x1xf32>
    %5 = arith.addf %3, %4 : vector<16x1xf32>
    %6 = math.rsqrt %5 : vector<16x1xf32>
    %7 = vector.broadcast %6 : vector<16x1xf32> to vector<16x128xf32>
    %8 = arith.mulf %0, %7 : vector<16x128xf32>
    %9 = arith.truncf %8 : vector<16x128xf32> to vector<16x128xbf16>
    %c0_2 = arith.constant 0 : index
    %c0_3 = arith.constant 0 : index
    %10 = vector.load %arg2[%c0_2, %c0_3] : memref<16x128xf32, #tpu.memory_space<vmem>>, vector<16x128xf32>
    %11 = arith.mulf %10, %10 : vector<16x128xf32>
    %cst_4 = arith.constant dense<0.000000e+00> : vector<16xf32>
    %12 = vector.multi_reduction <add>, %11, %cst_4 [1] : vector<16x128xf32> to vector<16xf32>
    %13 = vector.shape_cast %12 : vector<16xf32> to vector<16x1xf32>
    %cst_5 = arith.constant 9.99999996E-13 : f32
    %14 = vector.broadcast %cst_5 : f32 to vector<16x1xf32>
    %15 = arith.addf %13, %14 : vector<16x1xf32>
    %16 = math.rsqrt %15 : vector<16x1xf32>
    %17 = vector.broadcast %16 : vector<16x1xf32> to vector<16x128xf32>
    %18 = arith.mulf %10, %17 : vector<16x128xf32>
    %19 = arith.truncf %18 : vector<16x128xf32> to vector<16x128xbf16>
    %20 = arith.extf %9 : vector<16x128xbf16> to vector<16x128xf32>
    %21 = arith.extf %19 : vector<16x128xbf16> to vector<16x128xf32>
    %22 = arith.mulf %20, %21 : vector<16x128xf32>
    %cst_6 = arith.constant dense<0.000000e+00> : vector<16xf32>
    %23 = vector.multi_reduction <add>, %22, %cst_6 [1] : vector<16x128xf32> to vector<16xf32>
    %24 = vector.shape_cast %23 : vector<16xf32> to vector<16x1xf32>
    %cst_7 = arith.constant dense<0.000000e+00> : vector<16x16xf32>
    %25 = tpu.matmul %9, %19, %cst_7 {dimension_numbers = #tpu.dot_dimension_numbers<[1], [1], [0], [0], [0, 0, 1, 0], [], []>} : vector<16x128xbf16>, vector<16x128xbf16>, vector<16x16xf32> -> vector<16x16xf32>
    %cst_8 = arith.constant dense<0xFF800000> : vector<16xf32>
    %26 = vector.multi_reduction <maximumf>, %25, %cst_8 [1] : vector<16x16xf32> to vector<16xf32>
    %27 = vector.shape_cast %26 : vector<16xf32> to vector<16x1xf32>
    %28 = vector.broadcast %27 : vector<16x1xf32> to vector<16x16xf32>
    %29 = arith.subf %25, %28 : vector<16x16xf32>
    %30 = math.exp %29 : vector<16x16xf32>
    %cst_9 = arith.constant dense<0.000000e+00> : vector<16xf32>
    %31 = vector.multi_reduction <add>, %30, %cst_9 [1] : vector<16x16xf32> to vector<16xf32>
    %32 = vector.shape_cast %31 : vector<16xf32> to vector<16x1xf32>
    %33 = math.log %32 : vector<16x1xf32>
    %34 = arith.addf %27, %33 : vector<16x1xf32>
    %35 = arith.subf %34, %24 : vector<16x1xf32>
    %36 = tpu.iota {dimensions = array<i32: 1>} : vector<16x16xi32>
    %37 = tpu.iota {dimensions = array<i32: 0>} : vector<16x1xi32>
    %38 = vector.broadcast %27 : vector<16x1xf32> to vector<16x16xf32>
    %39 = arith.cmpf oeq, %25, %38 : vector<16x16xf32>
    %c16_i32 = arith.constant 16 : i32
    %40 = vector.broadcast %c16_i32 : i32 to vector<16x16xi32>
    %41 = arith.select %39, %36, %40 : vector<16x16xi1>, vector<16x16xi32>
    %cst_10 = arith.constant dense<2147483647> : vector<16xi32>
    %42 = vector.multi_reduction <minsi>, %41, %cst_10 [1] : vector<16x16xi32> to vector<16xi32>
    %43 = vector.shape_cast %42 : vector<16xi32> to vector<16x1xi32>
    %44 = arith.cmpi eq, %43, %37 : vector<16x1xi32>
    %45 = arith.extui %44 : vector<16x1xi1> to vector<16x1xi32>
    %46 = arith.sitofp %45 : vector<16x1xi32> to vector<16x1xf32>
    %47 = vector.broadcast %24 : vector<16x1xf32> to vector<16x16xf32>
    %48 = arith.cmpf ogt, %25, %47 : vector<16x16xf32>
    %49 = vector.broadcast %37 : vector<16x1xi32> to vector<16x16xi32>
    %50 = arith.cmpi ne, %36, %49 : vector<16x16xi32>
    %51 = arith.andi %48, %50 : vector<16x16xi1>
    %52 = arith.extui %51 : vector<16x16xi1> to vector<16x16xi32>
    %cst_11 = arith.constant dense<0> : vector<16xi32>
    %53 = vector.multi_reduction <add>, %52, %cst_11 [1] : vector<16x16xi32> to vector<16xi32>
    %54 = vector.shape_cast %53 : vector<16xi32> to vector<16x1xi32>
    %c5_i32 = arith.constant 5 : i32
    %55 = vector.broadcast %c5_i32 : i32 to vector<16x1xi32>
    %56 = arith.cmpi slt, %54, %55 : vector<16x1xi32>
    %57 = arith.extui %56 : vector<16x1xi1> to vector<16x1xi32>
    %58 = arith.sitofp %57 : vector<16x1xi32> to vector<16x1xf32>
    %c0_12 = arith.constant 0 : index
    %c0_13 = arith.constant 0 : index
    %59 = vector.load %arg4[%c0_12, %c0_13] : memref<16x1xf32, #tpu.memory_space<vmem>>, vector<16x1xf32>
    tpu.vector_store %arg4[%c0_12, %c0_13], %35 {strides = array<i32>} : memref<16x1xf32, #tpu.memory_space<vmem>>, vector<16x1xf32>,
    %c0_14 = arith.constant 0 : index
    %c0_15 = arith.constant 0 : index
    %60 = vector.load %arg5[%c0_14, %c0_15] : memref<16x1xf32, #tpu.memory_space<vmem>>, vector<16x1xf32>
    tpu.vector_store %arg5[%c0_14, %c0_15], %46 {strides = array<i32>} : memref<16x1xf32, #tpu.memory_space<vmem>>, vector<16x1xf32>,
    %c0_16 = arith.constant 0 : index
    %c0_17 = arith.constant 0 : index
    %61 = vector.load %arg6[%c0_16, %c0_17] : memref<16x1xf32, #tpu.memory_space<vmem>>, vector<16x1xf32>
    tpu.vector_store %arg6[%c0_16, %c0_17], %58 {strides = array<i32>} : memref<16x1xf32, #tpu.memory_space<vmem>>, vector<16x1xf32>,
    %c0_18 = arith.constant 0 : index
    %c0_19 = arith.constant 0 : index
    %62 = vector.load %arg3[%c0_18, %c0_19] : memref<16x1xf32, #tpu.memory_space<vmem>>, vector<16x1xf32>
    %c0_20 = arith.constant 0 : index
    %63 = memref.load %arg0[%c0_20] : memref<1xf32, #tpu.memory_space<smem>>
    %64 = arith.mulf %35, %62 : vector<16x1xf32>
    %65 = vector.shape_cast %64 : vector<16x1xf32> to vector<1x16x1xf32>
    %cst_21 = arith.constant dense<0.000000e+00> : vector<1xf32>
    %66 = vector.multi_reduction <add>, %65, %cst_21 [1, 2] : vector<1x16x1xf32> to vector<1xf32>
    %67 = vector.shape_cast %66 : vector<1xf32> to vector<1x1x1xf32>
    %68 = vector.extract %67[0, 0, 0] : f32 from vector<1x1x1xf32>
    %cst_22 = arith.constant 6.250000e-02 : f32
    %69 = arith.mulf %68, %cst_22 : f32
    %c0_23 = arith.constant 0 : index
    %70 = memref.load %arg7[%c0_23] : memref<7xf32, #tpu.memory_space<smem>>
    memref.store %69, %arg7[%c0_23] : memref<7xf32, #tpu.memory_space<smem>>
    %71 = vector.shape_cast %35 : vector<16x1xf32> to vector<1x16x1xf32>
    %cst_24 = arith.constant dense<0.000000e+00> : vector<1xf32>
    %72 = vector.multi_reduction <add>, %71, %cst_24 [1, 2] : vector<1x16x1xf32> to vector<1xf32>
    %73 = vector.shape_cast %72 : vector<1xf32> to vector<1x1x1xf32>
    %74 = vector.extract %73[0, 0, 0] : f32 from vector<1x1x1xf32>
    %cst_25 = arith.constant 6.250000e-02 : f32
    %75 = arith.mulf %74, %cst_25 : f32
    %c1 = arith.constant 1 : index
    %76 = memref.load %arg7[%c1] : memref<7xf32, #tpu.memory_space<smem>>
    memref.store %75, %arg7[%c1] : memref<7xf32, #tpu.memory_space<smem>>
    %77 = vector.shape_cast %46 : vector<16x1xf32> to vector<1x16x1xf32>
    %cst_26 = arith.constant dense<0.000000e+00> : vector<1xf32>
    %78 = vector.multi_reduction <add>, %77, %cst_26 [1, 2] : vector<1x16x1xf32> to vector<1xf32>
    %79 = vector.shape_cast %78 : vector<1xf32> to vector<1x1x1xf32>
    %80 = vector.extract %79[0, 0, 0] : f32 from vector<1x1x1xf32>
    %cst_27 = arith.constant 6.250000e-02 : f32
    %81 = arith.mulf %80, %cst_27 : f32
    %c2 = arith.constant 2 : index
    %82 = memref.load %arg7[%c2] : memref<7xf32, #tpu.memory_space<smem>>
    memref.store %81, %arg7[%c2] : memref<7xf32, #tpu.memory_space<smem>>
    %83 = vector.shape_cast %58 : vector<16x1xf32> to vector<1x16x1xf32>
    %cst_28 = arith.constant dense<0.000000e+00> : vector<1xf32>
    %84 = vector.multi_reduction <add>, %83, %cst_28 [1, 2] : vector<1x16x1xf32> to vector<1xf32>
    %85 = vector.shape_cast %84 : vector<1xf32> to vector<1x1x1xf32>
    %86 = vector.extract %85[0, 0, 0] : f32 from vector<1x1x1xf32>
    %cst_29 = arith.constant 6.250000e-02 : f32
    %87 = arith.mulf %86, %cst_29 : f32
    %c3 = arith.constant 3 : index
    %88 = memref.load %arg7[%c3] : memref<7xf32, #tpu.memory_space<smem>>
    memref.store %87, %arg7[%c3] : memref<7xf32, #tpu.memory_space<smem>>
    %89 = vector.shape_cast %62 : vector<16x1xf32> to vector<1x16x1xf32>
    %cst_30 = arith.constant dense<0.000000e+00> : vector<1xf32>
    %90 = vector.multi_reduction <add>, %89, %cst_30 [1, 2] : vector<1x16x1xf32> to vector<1xf32>
    %91 = vector.shape_cast %90 : vector<1xf32> to vector<1x1x1xf32>
    %92 = vector.extract %91[0, 0, 0] : f32 from vector<1x1x1xf32>
    %cst_31 = arith.constant 6.250000e-02 : f32
    %93 = arith.mulf %92, %cst_31 : f32
    %c4 = arith.constant 4 : index
    %94 = memref.load %arg7[%c4] : memref<7xf32, #tpu.memory_space<smem>>
    memref.store %93, %arg7[%c4] : memref<7xf32, #tpu.memory_space<smem>>
    %cst_32 = arith.constant 0.000000e+00 : f32
    %95 = arith.mulf %cst_32, %63 : f32
    %c5 = arith.constant 5 : index
    %96 = memref.load %arg7[%c5] : memref<7xf32, #tpu.memory_space<smem>>
    memref.store %95, %arg7[%c5] : memref<7xf32, #tpu.memory_space<smem>>
    %c6 = arith.constant 6 : index
    %97 = memref.load %arg7[%c6] : memref<7xf32, #tpu.memory_space<smem>>
    memref.store %63, %arg7[%c6] : memref<7xf32, #tpu.memory_space<smem>>
    return
  }
}

</mosaic_0001>

<llo_original>
// kernel: tpu_custom_call.1
$region0: #{tpu_custom_call.1}
  #allocation0 [shape = 'u32[]', space=smem, size = 0x4, offset = 0x4, fixed_abs, tag = 'smem constant byte address 0x4 - core index']
  #allocation1 [shape = 'u32[144,128]{1,0:T(1,128)}', space=vmem, size = 0x12000, scoped, tag = 'internal scratch']
  #allocation2 [shape = 'f32[1]{0:T(128)S(6)}', space=smem, size = 0x200, scoped, tag = 'scoped memory for tpu_custom_call.1']
  %s0 = inlined_call_operand.<no memory space> [shape: f32[1], index: 0, kind: input, shape index: {}]
  %s1 = inlined_call_operand.vmem [shape: f32[16,128], index: 1, kind: input, shape index: {}]
  %s2 = inlined_call_operand.hbm [shape: f32[16,128], index: 2, kind: input, shape index: {}]
  %s3 = inlined_call_operand.vmem [shape: f32[16,1], index: 3, kind: input, shape index: {}]
  %s4 = inlined_call_operand.vmem [shape: f32[16,1], index: 4, kind: output, shape index: {0}]
  %s5 = inlined_call_operand.vmem [shape: f32[16,1], index: 5, kind: output, shape index: {1}]
  %s6 = inlined_call_operand.vmem [shape: f32[16,1], index: 6, kind: output, shape index: {2}]
  %s7 = inlined_call_operand.hbm [shape: f32[7], index: 7, kind: output, shape index: {3}]
  %8 = xla_tuple %s4, %s5, %s6, %s7
  %s9 = sld [smem:[#allocation0]]
  $region54: #{tpu_custom_call.1} parent=0
    _
  %s11 = ssub.s32 1, %s9
  %s12 = scalar_select 0, %s11, %s9
  %13 = sst [smem:[#allocation2]] %s0
  $region1: #{tpu_custom_call.1} parent=0
    #allocation3 [shape = 'u8[8192]{0}', space=vmem, size = 0x2000, scoped, tag = 'input window, operand 2, single buffered']
    #allocation4 [shape = 's32[1]{0}', space=sflag, size = 0x4, scoped, tag = 'scoped memory for tpu_custom_call.1']
    #allocation5 [shape = 's32[1]{0}', space=sflag, size = 0x4, scoped, tag = 'scoped memory for tpu_custom_call.1']
    #allocation6 [shape = 'u8[512]{0}', space=smem, size = 0x200, scoped, tag = 'output window, operand 3, single buffered']
    %14 = vsyncpa [#allocation4], 0
    %15 = vsyncpa [#allocation5], 0
    // Predicated region
    $region2: #{tpu_custom_call.1} parent=1 // pred_check
      _
    $region3: #{tpu_custom_call.1} parent=1 // pred_check_branch
      %17 = sbr.rel (0) target = $region5
    $region4: #{tpu_custom_call.1} parent=1 // pred_region
      _
    $region5: #{tpu_custom_call.1} parent=1 // pred_fallthru
      _
    // Predicated region
    $region6: #{tpu_custom_call.1} parent=1 // pred_check
      _
    $region7: #{tpu_custom_call.1} parent=1 // pred_check_branch
      %19 = sbr.rel (0) target = $region9
    $region8: #{tpu_custom_call.1} parent=1 // pred_region
      _
    $region9: #{tpu_custom_call.1} parent=1 // pred_fallthru
      _
    // Predicated region
    $region10: #{tpu_custom_call.1} parent=1 // pred_check
      _
    $region11: #{tpu_custom_call.1} parent=1 // pred_check_branch
      %21 = sbr.rel (0) target = $region13
    $region12: #{tpu_custom_call.1} parent=1 // pred_region
      %s23 = ssub.s32 256, 256
      %24 = vsyncadd [#allocation4], %s23
      %s25 = sshll.u32 [#allocation3], 4
      %s26 = int_to_ptr.vmem [resolvable:$true] %s25
      %31 = dma.hbm_to_vmem [thread:$0]  %s2, 256, %s26, [#allocation4], 128, 128, 8
    $region13: #{tpu_custom_call.1} parent=1 // pred_fallthru
      _
    // Predicated region
    $region14: #{tpu_custom_call.1} parent=1 // pred_check
      _
    $region15: #{tpu_custom_call.1} parent=1 // pred_check_branch
      %33 = sbr.rel (0) target = $region17
    $region16: #{tpu_custom_call.1} parent=1 // pred_region
      _
    $region17: #{tpu_custom_call.1} parent=1 // pred_fallthru
      _
    // Predicated region
    $region18: #{tpu_custom_call.1} parent=1 // pred_check
      _
    $region19: #{tpu_custom_call.1} parent=1 // pred_check_branch
      %35 = sbr.rel (0) target = $region21
    $region20: #{tpu_custom_call.1} parent=1 // pred_region
      %36 = dma.done [#allocation4], 256
    $region21: #{tpu_custom_call.1} parent=1 // pred_fallthru
      _
    %v38 = vld [vmem:[%s1] sm:$0xff]
    %v39 = vld [vmem:[%s1 + $0x8] sm:$0xff]
    %v40 = vmul.f32 %v38, %v38
    %v41 = vmul.f32 %v39, %v39
    %42 = vadd.xlane.f32.xlu0 %v40
    %v43 = vpop.xlane.xlu0 %42
    %44 = vadd.xlane.f32.xlu0 %v41
    %v45 = vpop.xlane.xlu0 %44
    %v46 = vadd.f32 %v43, 1e-12
    %v47 = vadd.f32 %v45, 1e-12
    %v48 = vrsqrt.pop %v46
    %v49 = vrsqrt.pop %v47
    %v50 = vmul.f32 %v38, %v48
    %v51 = vmul.f32 %v39, %v49
    %v52 = vpack.c.bf16 %v51, %v50
    %v53 = vld [vmem:[#allocation3] sm:$0xff]
    %v54 = vld [vmem:[#allocation3 + $0x8] sm:$0xff]
    %v55 = vmul.f32 %v53, %v53
    %v56 = vmul.f32 %v54, %v54
    %57 = vadd.xlane.f32.xlu0 %v55
    %v58 = vpop.xlane.xlu0 %57
    %59 = vadd.xlane.f32.xlu0 %v56
    %v60 = vpop.xlane.xlu0 %59
    %v61 = vadd.f32 %v58, 1e-12
    %v62 = vadd.f32 %v60, 1e-12
    %v63 = vrsqrt.pop %v61
    %v64 = vrsqrt.pop %v62
    %v65 = vmul.f32 %v53, %v63
    %v66 = vmul.f32 %v54, %v64
    %v67 = vpack.c.bf16 %v66, %v65
    %v68 = vunpack.c.l.bf16 %v52
    %v69 = vunpack.c.h.bf16 %v52
    %v70 = vunpack.c.l.bf16 %v67
    %v71 = vunpack.c.h.bf16 %v67
    %v72 = vmul.f32 %v68, %v70
    %v73 = vmul.f32 %v69, %v71
    %74 = vadd.xlane.f32.xlu0 %v72
    %v75 = vpop.xlane.xlu0 %74
    %76 = vadd.xlane.f32.xlu0 %v73
    %v77 = vpop.xlane.xlu0 %76
    %78 = vmatprep.subr.bf16.mxu0 0
    %79 = vmatpush1.bf16.xpose.msra.mxu0 %v67
    %80 = vmatprep.subr.bf16.mxu0 0
    %81 = vmatpush1.bf16.xpose.msra.mxu0 0
    %82 = vmatprep.subr.bf16.mxu0 0
    %83 = vmatpush1.bf16.xpose.msra.mxu0 0
    %84 = vmatprep.subr.bf16.mxu0 0
    %85 = vmatpush1.bf16.xpose.msra.mxu0 0
    %86 = vmatprep.subr.bf16.mxu0 0
    %87 = vmatpush1.bf16.xpose.msra.mxu0 0
    %88 = vmatprep.subr.bf16.mxu0 0
    %89 = vmatpush1.bf16.xpose.msra.mxu0 0
    %90 = vmatprep.subr.bf16.mxu0 0
    %91 = vmatpush1.bf16.xpose.msra.mxu0 0
    %92 = vmatprep.subr.bf16.mxu0 0
    %93 = vmatpush1.bf16.xpose.msra.mxu0 0
    %94 = vmatprep.subr.bf16.mxu0 0
    %95 = vmatpush1.bf16.xpose.msra.mxu0 0
    %96 = vmatprep.subr.bf16.mxu0 0
    %97 = vmatpush1.bf16.xpose.msra.mxu0 0
    %98 = vmatprep.subr.bf16.mxu0 0
    %99 = vmatpush1.bf16.xpose.msra.mxu0 0
    %100 = vmatprep.subr.bf16.mxu0 0
    %101 = vmatpush1.bf16.xpose.msra.mxu0 0
    %102 = vmatprep.subr.bf16.mxu0 0
    %103 = vmatpush1.bf16.xpose.msra.mxu0 0
    %104 = vmatprep.subr.bf16.mxu0 0
    %105 = vmatpush1.bf16.xpose.msra.mxu0 0
    %106 = vmatprep.subr.bf16.mxu0 0
    %107 = vmatpush1.bf16.xpose.msra.mxu0 0
    %108 = vmatprep.subr.bf16.mxu0 0
    %109 = vmatpush1.bf16.xpose.msra.mxu0 0
    %110 = vmatprep.mubr.bf16.mxu0 0
    %111 = vmatmul.mubr.bf16.gmra.mrb[0].mxu0 %v52
    %v112 = vpop.f32.mrb[0].mxu0
    %v113 = vadd.f32 0.0, %v112
    %v114 = vpop.f32.mrb[0].mxu0
    %v115 = vpop.f32.mrb[0].mxu0
    %v116 = vadd.f32 0.0, %v115
    %v117 = vpop.f32.mrb[0].mxu0
    %118 = vdwg.mxu0
    %vm119 = vcmask 130048
    %v120 = vsel %vm119, %v113, -inf
    %121 = vmax.xlane.f32.xlu0 %v120
    %v122 = vpop.xlane.xlu0 %121
    %v123 = vsel %vm119, %v116, -inf
    %124 = vmax.xlane.f32.xlu0 %v123
    %v125 = vpop.xlane.xlu0 %124
    %v126 = vsub.f32 %v113, %v122
    %v127 = vsub.f32 %v116, %v125
    %v128 = vmul.f32 %v126, 1.442695
    %v129 = vpow.pop %v128
    %v130 = vmul.f32 %v127, 1.442695
    %v131 = vpow.pop %v130
    %v132 = vsel %vm119, %v129, 0.0
    %133 = vadd.xlane.f32.xlu0 %v132
    %v134 = vpop.xlane.xlu0 %133
    %v135 = vsel %vm119, %v131, 0.0
    %136 = vadd.xlane.f32.xlu0 %v135
    %v137 = vpop.xlane.xlu0 %136
    %v138 = vlog2.pop %v134
    %v139 = vmul.f32 %v138, 0.6931472
    %v140 = vlog2.pop %v137
    %v141 = vmul.f32 %v140, 0.6931472
    %v142 = vadd.f32 %v122, %v139
    %v143 = vadd.f32 %v125, %v141
    %v144 = vsub.f32 %v142, %v75
    %v145 = vsub.f32 %v143, %v77
    %v146 = vlaneseq
    %v147 = vand.u32 %v146, 127
    %v148 = vlaneseq
    %v149 = vshrl.u32 %v148, 7
    %v150 = vadd.s32 %v149, 8
    %vm151 = vcmp.eq.f32.partialorder %v113, %v122
    %vm152 = vcmp.eq.f32.partialorder %v116, %v125
    %v153 = vsel %vm151, %v147, 16
    %v154 = vsel %vm152, %v147, 16
    %v155 = vsel %vm119, %v153, 2147483647
    %v156 = vand.u32 %v155, 65535
    %v157 = vshra.s32 %v155, 16
    %v158 = vcvt.s32.f32 %v156
    %v159 = vcvt.s32.f32 %v157
    %160 = vmin.xlane.f32.xlu0 %v159
    %v161 = vpop.xlane.xlu0 %160
    %vm162 = vcmp.eq.f32.partialorder %v159, %v161
    %v163 = vsel %vm162, %v158, inf
    %164 = vmin.xlane.f32.xlu0 %v163
    %v165 = vpop.xlane.xlu0 %164
    %v166 = vcvt.f32.s32 %v165
    %v167 = vcvt.f32.s32 %v161
    %v168 = vshll.u32 %v167, 16
    %v169 = vadd.s32 %v168, %v166
    %v170 = vsel %vm119, %v154, 2147483647
    %v171 = vand.u32 %v170, 65535
    %v172 = vshra.s32 %v170, 16
    %v173 = vcvt.s32.f32 %v171
    %v174 = vcvt.s32.f32 %v172
    %175 = vmin.xlane.f32.xlu0 %v174
    %v176 = vpop.xlane.xlu0 %175
    %vm177 = vcmp.eq.f32.partialorder %v174, %v176
    %v178 = vsel %vm177, %v173, inf
    %179 = vmin.xlane.f32.xlu0 %v178
    %v180 = vpop.xlane.xlu0 %179
    %v181 = vcvt.f32.s32 %v180
    %v182 = vcvt.f32.s32 %v176
    %v183 = vshll.u32 %v182, 16
    %v184 = vadd.s32 %v183, %v181
    %vm185 = vcmp.eq.s32.totalorder %v169, %v149
    %vm186 = vcmp.eq.s32.totalorder %v184, %v150
    %v187 = vsel %vm185, 1, 0
    %v188 = vsel %vm186, 1, 0
    %v189 = vcvt.s32.f32 %v187
    %v190 = vcvt.s32.f32 %v188
    %vm191 = vcmp.gt.f32.partialorder %v113, %v75
    %vm192 = vcmp.gt.f32.partialorder %v116, %v77
    %vm193 = vcmp.ne.s32.totalorder %v147, %v149
    %vm194 = vcmp.ne.s32.totalorder %v147, %v150
    %vm195 = vmand %vm191, %vm193
    %vm196 = vmand %vm192, %vm194
    %v197 = vsel %vm195, 1, 0
    %v198 = vsel %vm196, 1, 0
    %v199 = vsel %vm119, %v197, 0
    %v200 = vand.u32 %v199, 65535
    %v201 = vshrl.u32 %v199, 16
    %v202 = vcvt.s32.f32 %v200
    %v203 = vcvt.s32.f32 %v201
    %204 = vadd.xlane.f32.xlu0 %v202
    %v205 = vpop.xlane.xlu0 %204
    %206 = vadd.xlane.f32.xlu0 %v203
    %v207 = vpop.xlane.xlu0 %206
    %v208 = vcvt.f32.s32 %v205
    %v209 = vcvt.f32.s32 %v207
    %v210 = vshll.u32 %v209, 16
    %v211 = vadd.s32 %v210, %v208
    %v212 = vsel %vm119, %v198, 0
    %v213 = vand.u32 %v212, 65535
    %v214 = vshrl.u32 %v212, 16
    %v215 = vcvt.s32.f32 %v213
    %v216 = vcvt.s32.f32 %v214
    %217 = vadd.xlane.f32.xlu0 %v215
    %v218 = vpop.xlane.xlu0 %217
    %219 = vadd.xlane.f32.xlu0 %v216
    %v220 = vpop.xlane.xlu0 %219
    %v221 = vcvt.f32.s32 %v218
    %v222 = vcvt.f32.s32 %v220
    %v223 = vshll.u32 %v222, 16
    %v224 = vadd.s32 %v223, %v221
    %vm225 = vcmp.lt.s32.totalorder %v211, 5
    %vm226 = vcmp.lt.s32.totalorder %v224, 5
    %v227 = vsel %vm225, 1, 0
    %v228 = vsel %vm226, 1, 0
    %v229 = vcvt.s32.f32 %v227
    %v230 = vcvt.s32.f32 %v228
    %vm231 = vcmask 7168
    %232 = vst.msk [vmem:[%s4] sm:$0xff] %vm231, %v144
    %233 = vst.msk [vmem:[%s4 + $0x8] sm:$0xff] %vm231, %v145
    %234 = vst.msk [vmem:[%s5] sm:$0xff] %vm231, %v189
    %235 = vst.msk [vmem:[%s5 + $0x8] sm:$0xff] %vm231, %v190
    %236 = vst.msk [vmem:[%s6] sm:$0xff] %vm231, %v229
    %237 = vst.msk [vmem:[%s6 + $0x8] sm:$0xff] %vm231, %v230
    %v238 = vld [vmem:[%s3] sm:$0xff]
    %v239 = vld [vmem:[%s3 + $0x8] sm:$0xff]
    %s240 = sld [smem:[#allocation2]]
    %v241 = vmul.f32 %v144, %v238
    %v242 = vmul.f32 %v145, %v239
    %v243 = vsel %vm231, %v241, 0.0
    %v244 = vsel %vm231, %v242, 0.0
    %v245 = vadd.f32 %v243, %v244
    %246 = vadd.xlane.f32.xlu0 %v245
    %v247 = vpop.xlane.xlu0 %246
    %v248 = vrot.slane %v247, 4
    %v249 = vadd.f32 %v247, %v248
    %v250 = vrot.slane %v249, 2
    %v251 = vadd.f32 %v249, %v250
    %v252 = vrot.slane %v251, 1
    %v253 = vadd.f32 %v251, %v252
    %s254 = vtos %v253
    %s255 = smul.f32 %s254, 0.0625
    %s256 = scalar_lea.smem [#allocation6], 0
    %257 = sst [smem:[%s256]] %s255
    %v258 = vsel %vm231, %v144, 0.0
    %v259 = vsel %vm231, %v145, 0.0
    %v260 = vadd.f32 %v258, %v259
    %261 = vadd.xlane.f32.xlu0 %v260
    %v262 = vpop.xlane.xlu0 %261
    %v263 = vrot.slane %v262, 4
    %v264 = vadd.f32 %v262, %v263
    %v265 = vrot.slane %v264, 2
    %v266 = vadd.f32 %v264, %v265
    %v267 = vrot.slane %v266, 1
    %v268 = vadd.f32 %v266, %v267
    %s269 = vtos %v268
    %s270 = smul.f32 %s269, 0.0625
    %s271 = scalar_lea.smem [#allocation6], 1
    %272 = sst [smem:[%s271]] %s270
    %v273 = vsel %vm231, %v189, 0.0
    %v274 = vsel %vm231, %v190, 0.0
    %v275 = vadd.f32 %v273, %v274
    %276 = vadd.xlane.f32.xlu0 %v275
    %v277 = vpop.xlane.xlu0 %276
    %v278 = vrot.slane %v277, 4
    %v279 = vadd.f32 %v277, %v278
    %v280 = vrot.slane %v279, 2
    %v281 = vadd.f32 %v279, %v280
    %v282 = vrot.slane %v281, 1
    %v283 = vadd.f32 %v281, %v282
    %s284 = vtos %v283
    %s285 = smul.f32 %s284, 0.0625
    %s286 = scalar_lea.smem [#allocation6], 2
    %287 = sst [smem:[%s286]] %s285
    %v288 = vsel %vm231, %v229, 0.0
    %v289 = vsel %vm231, %v230, 0.0
    %v290 = vadd.f32 %v288, %v289
    %291 = vadd.xlane.f32.xlu0 %v290
    %v292 = vpop.xlane.xlu0 %291
    %v293 = vrot.slane %v292, 4
    %v294 = vadd.f32 %v292, %v293
    %v295 = vrot.slane %v294, 2
    %v296 = vadd.f32 %v294, %v295
    %v297 = vrot.slane %v296, 1
    %v298 = vadd.f32 %v296, %v297
    %s299 = vtos %v298
    %s300 = smul.f32 %s299, 0.0625
    %s301 = scalar_lea.smem [#allocation6], 3
    %302 = sst [smem:[%s301]] %s300
    %v303 = vsel %vm231, %v238, 0.0
    %v304 = vsel %vm231, %v239, 0.0
    %v305 = vadd.f32 %v303, %v304
    %306 = vadd.xlane.f32.xlu0 %v305
    %v307 = vpop.xlane.xlu0 %306
    %v308 = vrot.slane %v307, 4
    %v309 = vadd.f32 %v307, %v308
    %v310 = vrot.slane %v309, 2
    %v311 = vadd.f32 %v309, %v310
    %v312 = vrot.slane %v311, 1
    %v313 = vadd.f32 %v311, %v312
    %s314 = vtos %v313
    %s315 = smul.f32 %s314, 0.0625
    %s316 = scalar_lea.smem [#allocation6], 4
    %317 = sst [smem:[%s316]] %s315
    %s318 = smul.f32 %s240, 0.0
    %s319 = scalar_lea.smem [#allocation6], 5
    %320 = sst [smem:[%s319]] %s318
    %s321 = scalar_lea.smem [#allocation6], 6
    %322 = sst [smem:[%s321]] %s240
    // Predicated region
    $region22: #{tpu_custom_call.1} parent=1 // pred_check
      _
    $region23: #{tpu_custom_call.1} parent=1 // pred_check_branch
      %324 = sbr.rel (0) target = $region25
    $region24: #{tpu_custom_call.1} parent=1 // pred_region
      _
    $region25: #{tpu_custom_call.1} parent=1 // pred_fallthru
      _
    // Predicated region
    $region26: #{tpu_custom_call.1} parent=1 // pred_check
      _
    $region27: #{tpu_custom_call.1} parent=1 // pred_check_branch
      %326 = sbr.rel (0) target = $region29
    $region28: #{tpu_custom_call.1} parent=1 // pred_region
      _
    $region29: #{tpu_custom_call.1} parent=1 // pred_fallthru
      _
    // Predicated region
    $region30: #{tpu_custom_call.1} parent=1 // pred_check
      _
    $region31: #{tpu_custom_call.1} parent=1 // pred_check_branch
      %328 = sbr.rel (0) target = $region33
    $region32: #{tpu_custom_call.1} parent=1 // pred_region
      _
    $region33: #{tpu_custom_call.1} parent=1 // pred_fallthru
      _
    // Predicated region
    $region34: #{tpu_custom_call.1} parent=1 // pred_check
      _
    $region35: #{tpu_custom_call.1} parent=1 // pred_check_branch
      %330 = sbr.rel (0) target = $region37
    $region36: #{tpu_custom_call.1} parent=1 // pred_region
      %s332 = ssub.s32 16, 16
      %333 = vsyncadd [#allocation5], %s332
      %336 = dma.smem_to_hbm [#allocation6], 16, %s7, [#allocation5]
    $region37: #{tpu_custom_call.1} parent=1 // pred_fallthru
      _
    // Predicated region
    $region38: #{tpu_custom_call.1} parent=1 // pred_check
      _
    $region39: #{tpu_custom_call.1} parent=1 // pred_check_branch
      %338 = sbr.rel (0) target = $region41
    $region40: #{tpu_custom_call.1} parent=1 // pred_region
      _
    $region41: #{tpu_custom_call.1} parent=1 // pred_fallthru
      _
    // Predicated region
    $region42: #{tpu_custom_call.1} parent=1 // pred_check
      _
    $region43: #{tpu_custom_call.1} parent=1 // pred_check_branch
      %340 = sbr.rel (0) target = $region45
    $region44: #{tpu_custom_call.1} parent=1 // pred_region
      _
    $region45: #{tpu_custom_call.1} parent=1 // pred_fallthru
      _
    // Predicated region
    $region46: #{tpu_custom_call.1} parent=1 // pred_check
      _
    $region47: #{tpu_custom_call.1} parent=1 // pred_check_branch
      %342 = sbr.rel (0) target = $region49
    $region48: #{tpu_custom_call.1} parent=1 // pred_region
      _
    $region49: #{tpu_custom_call.1} parent=1 // pred_fallthru
      _
    // Predicated region
    $region50: #{tpu_custom_call.1} parent=1 // pred_check
      _
    $region51: #{tpu_custom_call.1} parent=1 // pred_check_branch
      %344 = sbr.rel (0) target = $region53
    $region52: #{tpu_custom_call.1} parent=1 // pred_region
      %345 = dma.done [#allocation5], 16
    $region53: #{tpu_custom_call.1} parent=1 // pred_fallthru
      _
    %346 = sfence
    %347 = vsyncpa [#allocation4], 1
    %348 = vsyncpa [#allocation5], 1

</llo_original>
